<compile_context>
chip_gen: v7x
topology: tpu7x:2x2x1
jax: 0.10.0
libtpu: 0.0.40
codegen_flags: <defaults>
</compile_context>

<pallas_src>
import jax
import jax.numpy as jnp
from jax.experimental import pallas as pl
from jax.experimental.pallas import tpu as pltpu

# Module configuration (matches DiceLossV2 defaults, binary mode).
SMOOTH = 0.0
EPS = 1e-7
BASE_WEIGHT = 0.5
AUX_WEIGHT = 0.5
# TODO(synk): multiclass/multilabel modes, ignore_index and log_loss of
# smp.losses.DiceLoss are not implemented (binary mode, from_logits=True only).

LANES = 128
SUBLANES = 8
PAD_GRANULE = LANES * 32          # padded spatial rows R is a multiple of 32
LOGIT_PAD = -1e9                  # sigmoid(LOGIT_PAD) == 0.0 exactly in f32
ROWS_PER_Q = SUBLANES
NQ = 5                            # sum(p*t), sum(p*a), sum(p), sum(t), sum(a)
OUT_ROWS = NQ * ROWS_PER_Q        # 40


def _dice_sums_kernel(x_ref, t_ref, a_ref, o_ref):
    """Accumulate per-batch, per-lane partial sums for both dice terms."""
    r = pl.program_id(1)

    @pl.when(r == 0)
    def _():
        o_ref[...] = jnp.zeros_like(o_ref)

    x = x_ref[0].astype(jnp.float32)   # (TR, 128) logits
    t = t_ref[0].astype(jnp.float32)   # (TR, 128) target
    a = a_ref[0].astype(jnp.float32)   # (TR, 128) individual_mask
    p = jax.nn.sigmoid(x)              # single transcendental pass per block

    def psum8(q):
        # (TR, 128) -> (8, 128): fold along vreg boundaries, VPU adds only
        # (no cross-lane / cross-sublane XLU work inside the hot loop).
        return jnp.sum(q.reshape(-1, SUBLANES, LANES), axis=0)

    o_ref[0, 0:8, :] += psum8(p * t)   # dice intersection (main)
    o_ref[0, 8:16, :] += psum8(p * a)  # dice intersection (aux)
    o_ref[0, 16:24, :] += psum8(p)     # sum(p)  (shared cardinality part)
    o_ref[0, 24:32, :] += psum8(t)     # sum(t)
    o_ref[0, 32:40, :] += psum8(a)     # sum(a)


def _pad_and_tile(x, pad_value):
    """(B, ...) -> lane-dense (B, R, 128) with R a multiple of 32."""
    b = x.shape[0]
    x2 = x.reshape(b, -1)
    n = x2.shape[1]
    n_pad = -(-n // PAD_GRANULE) * PAD_GRANULE
    if n_pad != n:
        x2 = jnp.pad(x2, ((0, 0), (0, n_pad - n)), constant_values=pad_value)
    return x2.reshape(b, n_pad // LANES, LANES)


def _choose_tile_rows(r):
    # Largest tile whose double-buffered working set (3 planes x 2 buffers)
    # stays small on every generation: 2048*128*4B*6 = 6 MiB worst case.
    for tr in (2048, 1024, 512, 256, 128, 64, 32):
        if r % tr == 0:
            return tr
    return r  # unreachable given PAD_GRANULE; safe fallback (full extent)


def _dice_partial_sums(logits, target, aux):
    b, r, _ = logits.shape
    tr = _choose_tile_rows(r)

    def in_spec():
        return pl.BlockSpec((1, tr, LANES), lambda bi, ri: (bi, ri, 0))

    out_spec = pl.BlockSpec((1, OUT_ROWS, LANES), lambda bi, ri: (bi, 0, 0))

    return pl.pallas_call(
        _dice_sums_kernel,
        out_shape=jax.ShapeDtypeStruct((b, OUT_ROWS, LANES), jnp.float32),
        grid=(b, r // tr),
        in_specs=[in_spec(), in_spec(), in_spec()],
        out_specs=out_spec,
        compiler_params=pltpu.CompilerParams(
            dimension_semantics=("parallel", "arbitrary"),
            vmem_limit_bytes=32 * 1024 * 1024,
        ),
    )(logits, target, aux)


def _dice_loss_from_sums(inter, psum, tsum):
    dice = (2.0 * inter + SMOOTH) / jnp.maximum(psum + tsum + SMOOTH, EPS)
    return (1.0 - dice) * (tsum > 0).astype(jnp.float32)


@jax.jit
def dice_loss_v2(outputs, batch):
    """Forward pass of DiceLossV2 (binary mode, from_logits=True)."""
    b = outputs.shape[0]
    logits = _pad_and_tile(outputs, LOGIT_PAD)              # padded logits -> p == 0
    tgt = _pad_and_tile(batch["target"], 0)                 # padded masks  -> 0
    aux = _pad_and_tile(batch["individual_mask"], 0)

    parts = _dice_partial_sums(logits, tgt, aux)            # (B, 40, 128) f32
    s = parts.reshape(b, NQ, ROWS_PER_Q, LANES).sum(axis=(0, 2, 3))  # (5,)

    main_loss = _dice_loss_from_sums(s[0], s[2], s[3])      # DiceLoss(outputs, target)
    aux_loss = _dice_loss_from_sums(s[1], s[2], s[4])       # DiceLoss(outputs, individual_mask)
    return main_loss * BASE_WEIGHT + aux_loss * AUX_WEIGHT


# ---------------- pure-JAX reference (mirrors smp binary DiceLoss) ------------
def _ref_dice_loss_v2(outputs, batch):
    f32 = jnp.float32
    b = outputs.shape[0]

    def dice(logits, y):
        p = jax.nn.sigmoid(logits.astype(f32)).reshape(b, -1)
        y = y.reshape(b, -1).astype(f32)
        inter = jnp.sum(p * y)
        card = jnp.sum(p + y)
        d = (2.0 * inter + SMOOTH) / jnp.maximum(card + SMOOTH, EPS)
        return (1.0 - d) * (jnp.sum(y) > 0).astype(f32)

    return (dice(outputs, batch["target"]) * BASE_WEIGHT
            + dice(outputs, batch["individual_mask"]) * AUX_WEIGHT)


if __name__ == "__main__":
    key = jax.random.PRNGKey(0)
    k0, k1, k2 = jax.random.split(key, 3)
    B, C, H, W = 2, 1, 16, 16

    outputs = jax.random.normal(k0, (B, C, H, W), jnp.float32)
    target = (jax.random.uniform(k1, (B, C, H, W)) > 0.5).astype(jnp.float32)
    # narrow-dtype path: masks stay bf16 in HBM (0/1 exact), upcast in-kernel
    individual_mask = (jax.random.uniform(k2, (B, C, H, W)) > 0.5).astype(jnp.bfloat16)
    batch = {"target": target, "individual_mask": individual_mask}

    loss = dice_loss_v2(outputs, batch)
    jax.block_until_ready(loss)

    ref = _ref_dice_loss_v2(outputs, batch)
    assert abs(float(loss) - float(ref)) < 1e-4, (float(loss), float(ref))

    print("KERNEL_OK")
</pallas_src>

<mosaic_0001>
module attributes {stable_mosaic.version = 11 : i64} {
  func.func @_dice_sums_kernel(%arg0: i32, %arg1: i32, %arg2: memref<1x32x128xf32, #tpu.memory_space<vmem>>, %arg3: memref<1x32x128xf32, #tpu.memory_space<vmem>>, %arg4: memref<1x32x128xbf16, #tpu.memory_space<vmem>>, %arg5: memref<1x40x128xf32, #tpu.memory_space<vmem>>) attributes {dimension_semantics = [#tpu.dimension_semantics<parallel>, #tpu.dimension_semantics<arbitrary>], iteration_bounds = array<i64: 2, 1>, scalar_prefetch = 0 : i64, scratch_operands = 0 : i64, tpu.core_type = #tpu.core_type<tc>, window_params = [{transform_indices = @transform_0, window_bounds = array<i64: 1, 32, 128>}, {transform_indices = @transform_1, window_bounds = array<i64: 1, 32, 128>}, {transform_indices = @transform_2, window_bounds = array<i64: 1, 32, 128>}, {transform_indices = @transform_3, window_bounds = array<i64: 1, 40, 128>}]} {
    %c0_i32 = arith.constant 0 : i32
    %0 = arith.cmpi eq, %arg1, %c0_i32 : i32
    %1 = arith.extui %0 : i1 to i32
    %c0_i32_0 = arith.constant 0 : i32
    %2 = arith.cmpi ne, %1, %c0_i32_0 : i32
    scf.if %2 {
      %cst_40 = arith.constant 0.000000e+00 : f32
      %57 = vector.broadcast %cst_40 : f32 to vector<1x40x128xf32>
      %c0_41 = arith.constant 0 : index
      %c0_42 = arith.constant 0 : index
      %c0_43 = arith.constant 0 : index
      %58 = vector.load %arg5[%c0_41, %c0_42, %c0_43] : memref<1x40x128xf32, #tpu.memory_space<vmem>>, vector<1x40x128xf32>
      tpu.vector_store %arg5[%c0_41, %c0_42, %c0_43], %57 {strides = array<i32>} : memref<1x40x128xf32, #tpu.memory_space<vmem>>, vector<1x40x128xf32>,
    } else {
    }
    %c0 = arith.constant 0 : index
    %c0_1 = arith.constant 0 : index
    %c0_2 = arith.constant 0 : index
    %3 = vector.load %arg2[%c0, %c0_1, %c0_2] : memref<1x32x128xf32, #tpu.memory_space<vmem>>, vector<1x32x128xf32>
    %4 = vector.shape_cast %3 : vector<1x32x128xf32> to vector<32x128xf32>
    %c0_3 = arith.constant 0 : index
    %c0_4 = arith.constant 0 : index
    %c0_5 = arith.constant 0 : index
    %5 = vector.load %arg3[%c0_3, %c0_4, %c0_5] : memref<1x32x128xf32, #tpu.memory_space<vmem>>, vector<1x32x128xf32>
    %6 = vector.shape_cast %5 : vector<1x32x128xf32> to vector<32x128xf32>
    %c0_6 = arith.constant 0 : index
    %c0_7 = arith.constant 0 : index
    %c0_8 = arith.constant 0 : index
    %7 = vector.load %arg4[%c0_6, %c0_7, %c0_8] : memref<1x32x128xbf16, #tpu.memory_space<vmem>>, vector<1x32x128xbf16>
    %8 = vector.shape_cast %7 : vector<1x32x128xbf16> to vector<32x128xbf16>
    %9 = arith.extf %8 : vector<32x128xbf16> to vector<32x128xf32>
    %10 = arith.negf %4 : vector<32x128xf32>
    %11 = math.exp %10 : vector<32x128xf32>
    %cst = arith.constant 1.000000e+00 : f32
    %12 = vector.broadcast %cst : f32 to vector<32x128xf32>
    %13 = arith.addf %12, %11 : vector<32x128xf32>
    %14 = arith.divf %12, %13 : vector<32x128xf32>
    %c0_9 = arith.constant 0 : index
    %c0_10 = arith.constant 0 : index
    %c0_11 = arith.constant 0 : index
    %15 = vector.load %arg5[%c0_9, %c0_10, %c0_11] : memref<1x40x128xf32, #tpu.memory_space<vmem>>, vector<1x8x128xf32>
    %16 = vector.shape_cast %15 : vector<1x8x128xf32> to vector<8x128xf32>
    %17 = arith.mulf %14, %6 : vector<32x128xf32>
    %18 = vector.shape_cast %17 : vector<32x128xf32> to vector<4x8x128xf32>
    %cst_12 = arith.constant dense<0.000000e+00> : vector<8x128xf32>
    %19 = vector.multi_reduction <add>, %18, %cst_12 [0] : vector<4x8x128xf32> to vector<8x128xf32>
    %20 = arith.addf %16, %19 : vector<8x128xf32>
    %c0_13 = arith.constant 0 : index
    %c0_14 = arith.constant 0 : index
    %c0_15 = arith.constant 0 : index
    %21 = vector.load %arg5[%c0_13, %c0_14, %c0_15] : memref<1x40x128xf32, #tpu.memory_space<vmem>>, vector<1x8x128xf32>
    %22 = vector.shape_cast %21 : vector<1x8x128xf32> to vector<8x128xf32>
    %23 = vector.shape_cast %20 : vector<8x128xf32> to vector<1x8x128xf32>
    tpu.vector_store %arg5[%c0_13, %c0_14, %c0_15], %23 {strides = array<i32>} : memref<1x40x128xf32, #tpu.memory_space<vmem>>, vector<1x8x128xf32>,
    %c0_16 = arith.constant 0 : index
    %c8 = arith.constant 8 : index
    %c0_17 = arith.constant 0 : index
    %24 = vector.load %arg5[%c0_16, %c8, %c0_17] : memref<1x40x128xf32, #tpu.memory_space<vmem>>, vector<1x8x128xf32>
    %25 = vector.shape_cast %24 : vector<1x8x128xf32> to vector<8x128xf32>
    %26 = arith.mulf %14, %9 : vector<32x128xf32>
    %27 = vector.shape_cast %26 : vector<32x128xf32> to vector<4x8x128xf32>
    %cst_18 = arith.constant dense<0.000000e+00> : vector<8x128xf32>
    %28 = vector.multi_reduction <add>, %27, %cst_18 [0] : vector<4x8x128xf32> to vector<8x128xf32>
    %29 = arith.addf %25, %28 : vector<8x128xf32>
    %c0_19 = arith.constant 0 : index
    %c8_20 = arith.constant 8 : index
    %c0_21 = arith.constant 0 : index
    %30 = vector.load %arg5[%c0_19, %c8_20, %c0_21] : memref<1x40x128xf32, #tpu.memory_space<vmem>>, vector<1x8x128xf32>
    %31 = vector.shape_cast %30 : vector<1x8x128xf32> to vector<8x128xf32>
    %32 = vector.shape_cast %29 : vector<8x128xf32> to vector<1x8x128xf32>
    tpu.vector_store %arg5[%c0_19, %c8_20, %c0_21], %32 {strides = array<i32>} : memref<1x40x128xf32, #tpu.memory_space<vmem>>, vector<1x8x128xf32>,
    %c0_22 = arith.constant 0 : index
    %c16 = arith.constant 16 : index
    %c0_23 = arith.constant 0 : index
    %33 = vector.load %arg5[%c0_22, %c16, %c0_23] : memref<1x40x128xf32, #tpu.memory_space<vmem>>, vector<1x8x128xf32>
    %34 = vector.shape_cast %33 : vector<1x8x128xf32> to vector<8x128xf32>
    %35 = vector.shape_cast %14 : vector<32x128xf32> to vector<4x8x128xf32>
    %cst_24 = arith.constant dense<0.000000e+00> : vector<8x128xf32>
    %36 = vector.multi_reduction <add>, %35, %cst_24 [0] : vector<4x8x128xf32> to vector<8x128xf32>
    %37 = arith.addf %34, %36 : vector<8x128xf32>
    %c0_25 = arith.constant 0 : index
    %c16_26 = arith.constant 16 : index
    %c0_27 = arith.constant 0 : index
    %38 = vector.load %arg5[%c0_25, %c16_26, %c0_27] : memref<1x40x128xf32, #tpu.memory_space<vmem>>, vector<1x8x128xf32>
    %39 = vector.shape_cast %38 : vector<1x8x128xf32> to vector<8x128xf32>
    %40 = vector.shape_cast %37 : vector<8x128xf32> to vector<1x8x128xf32>
    tpu.vector_store %arg5[%c0_25, %c16_26, %c0_27], %40 {strides = array<i32>} : memref<1x40x128xf32, #tpu.memory_space<vmem>>, vector<1x8x128xf32>,
    %c0_28 = arith.constant 0 : index
    %c24 = arith.constant 24 : index
    %c0_29 = arith.constant 0 : index
    %41 = vector.load %arg5[%c0_28, %c24, %c0_29] : memref<1x40x128xf32, #tpu.memory_space<vmem>>, vector<1x8x128xf32>
    %42 = vector.shape_cast %41 : vector<1x8x128xf32> to vector<8x128xf32>
    %43 = vector.shape_cast %6 : vector<32x128xf32> to vector<4x8x128xf32>
    %cst_30 = arith.constant dense<0.000000e+00> : vector<8x128xf32>
    %44 = vector.multi_reduction <add>, %43, %cst_30 [0] : vector<4x8x128xf32> to vector<8x128xf32>
    %45 = arith.addf %42, %44 : vector<8x128xf32>
    %c0_31 = arith.constant 0 : index
    %c24_32 = arith.constant 24 : index
    %c0_33 = arith.constant 0 : index
    %46 = vector.load %arg5[%c0_31, %c24_32, %c0_33] : memref<1x40x128xf32, #tpu.memory_space<vmem>>, vector<1x8x128xf32>
    %47 = vector.shape_cast %46 : vector<1x8x128xf32> to vector<8x128xf32>
    %48 = vector.shape_cast %45 : vector<8x128xf32> to vector<1x8x128xf32>
    tpu.vector_store %arg5[%c0_31, %c24_32, %c0_33], %48 {strides = array<i32>} : memref<1x40x128xf32, #tpu.memory_space<vmem>>, vector<1x8x128xf32>,
    %c0_34 = arith.constant 0 : index
    %c32 = arith.constant 32 : index
    %c0_35 = arith.constant 0 : index
    %49 = vector.load %arg5[%c0_34, %c32, %c0_35] : memref<1x40x128xf32, #tpu.memory_space<vmem>>, vector<1x8x128xf32>
    %50 = vector.shape_cast %49 : vector<1x8x128xf32> to vector<8x128xf32>
    %51 = vector.shape_cast %9 : vector<32x128xf32> to vector<4x8x128xf32>
    %cst_36 = arith.constant dense<0.000000e+00> : vector<8x128xf32>
    %52 = vector.multi_reduction <add>, %51, %cst_36 [0] : vector<4x8x128xf32> to vector<8x128xf32>
    %53 = arith.addf %50, %52 : vector<8x128xf32>
    %c0_37 = arith.constant 0 : index
    %c32_38 = arith.constant 32 : index
    %c0_39 = arith.constant 0 : index
    %54 = vector.load %arg5[%c0_37, %c32_38, %c0_39] : memref<1x40x128xf32, #tpu.memory_space<vmem>>, vector<1x8x128xf32>
    %55 = vector.shape_cast %54 : vector<1x8x128xf32> to vector<8x128xf32>
    %56 = vector.shape_cast %53 : vector<8x128xf32> to vector<1x8x128xf32>
    tpu.vector_store %arg5[%c0_37, %c32_38, %c0_39], %56 {strides = array<i32>} : memref<1x40x128xf32, #tpu.memory_space<vmem>>, vector<1x8x128xf32>,
    return
  }
  func.func @transform_0(%arg0: i32, %arg1: i32) -> (i32, i32, i32) {
    %c0_i32 = arith.constant 0 : i32
    %c0_i32_0 = arith.constant 0 : i32
    return %arg0, %arg1, %c0_i32 : i32, i32, i32
  }
  func.func @transform_1(%arg0: i32, %arg1: i32) -> (i32, i32, i32) {
    %c0_i32 = arith.constant 0 : i32
    %c0_i32_0 = arith.constant 0 : i32
    return %arg0, %arg1, %c0_i32 : i32, i32, i32
  }
  func.func @transform_2(%arg0: i32, %arg1: i32) -> (i32, i32, i32) {
    %c0_i32 = arith.constant 0 : i32
    %c0_i32_0 = arith.constant 0 : i32
    return %arg0, %arg1, %c0_i32 : i32, i32, i32
  }
  func.func @transform_3(%arg0: i32, %arg1: i32) -> (i32, i32, i32) {
    %c0_i32 = arith.constant 0 : i32
    %c0_i32_0 = arith.constant 0 : i32
    %c0_i32_1 = arith.constant 0 : i32
    return %arg0, %c0_i32, %c0_i32_0 : i32, i32, i32
  }
}

</mosaic_0001>

<llo_original>
// kernel: dice_loss_v2.1
$region0: #{dice_loss_v2.1}
  #allocation0 [shape = 'u32[]', space=smem, size = 0x4, offset = 0x4, fixed_abs, tag = 'smem constant byte address 0x4 - core index']
  #allocation1 [shape = 'u32[144,128]{1,0:T(1,128)}', space=vmem, size = 0x12000, scoped, tag = 'internal scratch']
  %s0 = inlined_call_operand.vmem [shape: f32[2,32,128], index: 0, kind: input, shape index: {}]
  %s1 = inlined_call_operand.vmem [shape: f32[2,32,128], index: 1, kind: input, shape index: {}]
  %s2 = inlined_call_operand.vmem [shape: bf16[2,32,128], index: 2, kind: input, shape index: {}]
  %s3 = inlined_call_operand.vmem [shape: f32[2,40,128], index: 3, kind: output, shape index: {}]
  %s4 = sld [smem:[#allocation0]]
  $region49: #{dice_loss_v2.1} parent=0
    _
  %s6 = ssub.s32 1, %s4
  %s7 = scalar_select 0, %s6, %s4
  loop: start=0, step=1, limit=4
  $region2: #{dice_loss_v2.1} parent=0 // loop_pre_header
    _
  $region3: #{dice_loss_v2.1} parent=0 // loop_header
    %s9 = sphi 0, %s13
    %p10 = scmp.ge.s32.totalorder %s9, 4
    %s16 = sphi 0, %s28
    %s17 = sphi 0, %s24
    %s18 = sphi 0, %s16
    %s19 = sphi 0, %s17
    %s20 = sphi 0, %s18
    %s21 = sphi 0, %s19
    %s33 = sphi 0, %s35
    %s36 = sphi 0, %s33
    %s37 = sphi 0, %s36
    %s53 = sphi 0, %s37
    %s61 = sphi 0, %s63
    %s64 = sphi 0, %s61
    %s65 = sphi 0, %s64
    %s81 = sphi 0, %s65
    %s89 = sphi 0, %s91
    %s92 = sphi 0, %s89
    %s93 = sphi 0, %s92
    %s109 = sphi 0, %s93
    %s115 = sphi 0, %s117
    %s118 = sphi 0, %s115
    %s119 = sphi 0, %s118
    %s135 = sphi 0, %s119
  $region4: #{dice_loss_v2.1} parent=0 // loop_header_branch
    %12 = sbr.rel (%p10) target = $region8
  $region5: #{dice_loss_v2.1} parent=0 // loop_body
    %s14 = ssub.s32 %s9, 1
    %s15 = ssub.s32 %s9, 2
    %s22 = sadd.s32 1, %s17
    %p23 = scmp.ge.s32.totalorder %s22, 1
    %s24 = scalar_select %p23, 0, %s22
    %s25 = sadd.s32 1, %s16
    %s26 = scalar_select %p23, %s25, %s16
    %p27 = scmp.ge.s32.totalorder %s26, 2
    %s28 = scalar_select %p27, 0, %s26
    %s29 = ssub.s32 %s16, %s28
    %s30 = ssub.s32 %s17, %s24
    %s31 = sor.u32 %s29, %s30
    %p32 = scmp.eq.s32.totalorder %s31, 0
    %s34 = sadd.s32 %s33, 1
    %s35 = scalar_select %p32, %s33, %s34
    %p38 = pneg %p32
    %p39 = scmp.eq.s32.totalorder %s9, 1
    %p40 = por %p38, %p39
    %p41 = scmp.ne.s32.totalorder %s33, %s36
    %p42 = scmp.eq.s32.totalorder %s9, 0
    %p43 = por %p41, %p42
    %p44 = scmp.ne.s32.totalorder %s33, %s36
    %p45 = scmp.eq.s32.totalorder %s14, 1
    %p46 = por %p44, %p45
    %p47 = scmp.ne.s32.totalorder %s36, %s37
    %p48 = scmp.eq.s32.totalorder %s14, 0
    %p49 = por %p47, %p48
    %p50 = scmp.ne.s32.totalorder %s36, %s37
    %p51 = scmp.eq.s32.totalorder %s15, 1
    %p52 = por %p50, %p51
    %p54 = scmp.ne.s32.totalorder %s37, %s53
    %p55 = scmp.eq.s32.totalorder %s15, 0
    %p56 = por %p54, %p55
    %s57 = ssub.s32 %s16, %s28
    %s58 = ssub.s32 %s17, %s24
    %s59 = sor.u32 %s57, %s58
    %p60 = scmp.eq.s32.totalorder %s59, 0
    %s62 = sadd.s32 %s61, 1
    %s63 = scalar_select %p60, %s61, %s62
    %p66 = pneg %p60
    %p67 = scmp.eq.s32.totalorder %s9, 1
    %p68 = por %p66, %p67
    %p69 = scmp.ne.s32.totalorder %s61, %s64
    %p70 = scmp.eq.s32.totalorder %s9, 0
    %p71 = por %p69, %p70
    %p72 = scmp.ne.s32.totalorder %s61, %s64
    %p73 = scmp.eq.s32.totalorder %s14, 1
    %p74 = por %p72, %p73
    %p75 = scmp.ne.s32.totalorder %s64, %s65
    %p76 = scmp.eq.s32.totalorder %s14, 0
    %p77 = por %p75, %p76
    %p78 = scmp.ne.s32.totalorder %s64, %s65
    %p79 = scmp.eq.s32.totalorder %s15, 1
    %p80 = por %p78, %p79
    %p82 = scmp.ne.s32.totalorder %s65, %s81
    %p83 = scmp.eq.s32.totalorder %s15, 0
    %p84 = por %p82, %p83
    %s85 = ssub.s32 %s16, %s28
    %s86 = ssub.s32 %s17, %s24
    %s87 = sor.u32 %s85, %s86
    %p88 = scmp.eq.s32.totalorder %s87, 0
    %s90 = sadd.s32 %s89, 1
    %s91 = scalar_select %p88, %s89, %s90
    %p94 = pneg %p88
    %p95 = scmp.eq.s32.totalorder %s9, 1
    %p96 = por %p94, %p95
    %p97 = scmp.ne.s32.totalorder %s89, %s92
    %p98 = scmp.eq.s32.totalorder %s9, 0
    %p99 = por %p97, %p98
    %p100 = scmp.ne.s32.totalorder %s89, %s92
    %p101 = scmp.eq.s32.totalorder %s14, 1
    %p102 = por %p100, %p101
    %p103 = scmp.ne.s32.totalorder %s92, %s93
    %p104 = scmp.eq.s32.totalorder %s14, 0
    %p105 = por %p103, %p104
    %p106 = scmp.ne.s32.totalorder %s92, %s93
    %p107 = scmp.eq.s32.totalorder %s15, 1
    %p108 = por %p106, %p107
    %p110 = scmp.ne.s32.totalorder %s93, %s109
    %p111 = scmp.eq.s32.totalorder %s15, 0
    %p112 = por %p110, %p111
    %s113 = ssub.s32 %s16, %s28
    %p114 = scmp.eq.s32.totalorder %s113, 0
    %s116 = sadd.s32 %s115, 1
    %s117 = scalar_select %p114, %s115, %s116
    %p120 = pneg %p114
    %p121 = scmp.eq.s32.totalorder %s9, 1
    %p122 = por %p120, %p121
    %p123 = scmp.ne.s32.totalorder %s115, %s118
    %p124 = scmp.eq.s32.totalorder %s9, 0
    %p125 = por %p123, %p124
    %p126 = scmp.ne.s32.totalorder %s115, %s118
    %p127 = scmp.eq.s32.totalorder %s14, 1
    %p128 = por %p126, %p127
    %p129 = scmp.ne.s32.totalorder %s118, %s119
    %p130 = scmp.eq.s32.totalorder %s14, 0
    %p131 = por %p129, %p130
    %p132 = scmp.ne.s32.totalorder %s118, %s119
    %p133 = scmp.eq.s32.totalorder %s15, 1
    %p134 = por %p132, %p133
    %p136 = scmp.ne.s32.totalorder %s119, %s135
    %p137 = scmp.eq.s32.totalorder %s15, 0
    %p138 = por %p136, %p137
    %p139 = scmp.le.s32.totalorder 1, %s9
    %p140 = scmp.lt.s32.totalorder %s9, 3
    %p141 = pnand %p139, %p140
    %p142 = pneg %p141
    // Predicated region
    $region9: #{dice_loss_v2.1} parent=5 // pred_check
      _
    $region10: #{dice_loss_v2.1} parent=5 // pred_check_branch
      %144 = sbr.rel (%p141) target = $region12
    $region11: #{dice_loss_v2.1} parent=5 // pred_region
      %s145 = ssub.s32 %s9, 1
    $region12: #{dice_loss_v2.1} parent=5 // pred_fallthru
      _
    %p146 = scmp.lt.s32.totalorder %s9, 2
    // Predicated region
    $region13: #{dice_loss_v2.1} parent=5 // pred_check
      %p147 = pneg %p146
    $region14: #{dice_loss_v2.1} parent=5 // pred_check_branch
      %149 = sbr.rel (%p147) target = $region16
    $region15: #{dice_loss_v2.1} parent=5 // pred_region
      // Predicated region
      $region17: #{dice_loss_v2.1} parent=15 // pred_check
        %p150 = pneg %p43
      $region18: #{dice_loss_v2.1} parent=15 // pred_check_branch
        %152 = sbr.rel (%p150) target = $region20
      $region19: #{dice_loss_v2.1} parent=15 // pred_region
        %s153 = smul.u32 4, %s17
        %p154 = scmp.lt.s32.totalorder %s16, 1
        %s155 = scalar_select %p154, %s16, 1
        %p156 = scmp.lt.s32.totalorder %s153, 3
        %s157 = scalar_select %p156, %s153, 3
        %s158 = smul.addr %s155, 4
        %s159 = sadd.s32 %s157, %s158
        %s160 = smul.addr %s159, 8
        %s161 = scalar_lea.vmem %s0, %s160
        %s162 = smul.u32 4, %s17
      $region20: #{dice_loss_v2.1} parent=15 // pred_fallthru
        _
      // Predicated region
      $region21: #{dice_loss_v2.1} parent=15 // pred_check
        %p163 = pneg %p71
      $region22: #{dice_loss_v2.1} parent=15 // pred_check_branch
        %165 = sbr.rel (%p163) target = $region24
      $region23: #{dice_loss_v2.1} parent=15 // pred_region
        %s166 = smul.u32 4, %s17
        %p167 = scmp.lt.s32.totalorder %s16, 1
        %s168 = scalar_select %p167, %s16, 1
        %p169 = scmp.lt.s32.totalorder %s166, 3
        %s170 = scalar_select %p169, %s166, 3
        %s171 = smul.addr %s168, 4
        %s172 = sadd.s32 %s170, %s171
        %s173 = smul.addr %s172, 8
        %s174 = scalar_lea.vmem %s1, %s173
        %s175 = smul.u32 4, %s17
      $region24: #{dice_loss_v2.1} parent=15 // pred_fallthru
        _
      // Predicated region
      $region25: #{dice_loss_v2.1} parent=15 // pred_check
        %p176 = pneg %p99
      $region26: #{dice_loss_v2.1} parent=15 // pred_check_branch
        %178 = sbr.rel (%p176) target = $region28
      $region27: #{dice_loss_v2.1} parent=15 // pred_region
        %s179 = smul.u32 4, %s17
        %p180 = scmp.lt.s32.totalorder %s16, 1
        %s181 = scalar_select %p180, %s16, 1
        %p182 = scmp.lt.s32.totalorder %s179, 3
        %s183 = scalar_select %p182, %s179, 3
        %s184 = smul.addr %s181, 4
        %s185 = sadd.s32 %s183, %s184
        %s186 = smul.addr %s185, 4
        %s187 = scalar_lea.vmem %s2, %s186
        %s188 = smul.u32 4, %s17
      $region28: #{dice_loss_v2.1} parent=15 // pred_fallthru
        _
    $region16: #{dice_loss_v2.1} parent=5 // pred_fallthru
      _
    %p189 = scmp.le.s32.totalorder 1, %s9
    %p190 = scmp.lt.s32.totalorder %s9, 3
    %p191 = pnand %p189, %p190
    %p192 = pneg %p191
    // Predicated region
    $region29: #{dice_loss_v2.1} parent=5 // pred_check
      _
    $region30: #{dice_loss_v2.1} parent=5 // pred_check_branch
      %194 = sbr.rel (%p191) target = $region32
    $region31: #{dice_loss_v2.1} parent=5 // pred_region
      %s195 = ssub.s32 %s9, 1
      %s196 = smul.u32 4, %s19
      %p197 = scmp.lt.s32.totalorder %s18, 1
      %s198 = scalar_select %p197, %s18, 1
      %p199 = scmp.lt.s32.totalorder %s196, 3
      %s200 = scalar_select %p199, %s196, 3
      %s201 = smul.addr %s198, 4
      %s202 = sadd.s32 %s200, %s201
      %s203 = smul.addr %s202, 8
      %s204 = scalar_lea.vmem %s0, %s203
      %p205 = pneg %p49
      %p206 = pneg %p46
      %s207 = smul.u32 4, %s19
      %p208 = scmp.lt.s32.totalorder %s18, 1
      %s209 = scalar_select %p208, %s18, 1
      %p210 = scmp.lt.s32.totalorder %s207, 3
      %s211 = scalar_select %p210, %s207, 3
      %s212 = smul.addr %s209, 4
      %s213 = sadd.s32 %s211, %s212
      %s214 = smul.addr %s213, 8
      %s215 = scalar_lea.vmem %s1, %s214
      %p216 = pneg %p77
      %p217 = pneg %p74
      %s218 = smul.u32 4, %s19
      %p219 = scmp.lt.s32.totalorder %s18, 1
      %s220 = scalar_select %p219, %s18, 1
      %p221 = scmp.lt.s32.totalorder %s218, 3
      %s222 = scalar_select %p221, %s218, 3
      %s223 = smul.addr %s220, 4
      %s224 = sadd.s32 %s222, %s223
      %s225 = smul.addr %s224, 4
      %s226 = scalar_lea.vmem %s2, %s225
      %p227 = pneg %p105
      %p228 = pneg %p102
      %p229 = pneg %p131
      %p230 = pneg %p128
      %p231 = scmp.lt.s32.totalorder %s18, 1
      %s232 = scalar_select %p231, %s18, 1
      %s233 = smul.addr %s232, 5
      %s234 = smul.addr %s233, 8
      %s235 = scalar_lea.vmem %s3, %s234
      %s236 = smul.u32 4, %s19
      %p237 = scmp.lt.s32.totalorder %s18, 1
      %s238 = scalar_select %p237, %s18, 1
      %p239 = scmp.lt.s32.totalorder %s236, 3
      %s240 = scalar_select %p239, %s236, 3
      %s241 = smul.addr %s238, 4
      %s242 = sadd.s32 %s240, %s241
      %s243 = smul.addr %s242, 8
      %s244 = scalar_lea.vmem %s0, %s243
      %s245 = smul.u32 4, %s19
      %s246 = smul.u32 4, %s19
      %p247 = scmp.lt.s32.totalorder %s18, 1
      %s248 = scalar_select %p247, %s18, 1
      %p249 = scmp.lt.s32.totalorder %s246, 3
      %s250 = scalar_select %p249, %s246, 3
      %s251 = smul.addr %s248, 4
      %s252 = sadd.s32 %s250, %s251
      %s253 = smul.addr %s252, 8
      %s254 = scalar_lea.vmem %s1, %s253
      %s255 = smul.u32 4, %s19
      %s256 = smul.u32 4, %s19
      %p257 = scmp.lt.s32.totalorder %s18, 1
      %s258 = scalar_select %p257, %s18, 1
      %p259 = scmp.lt.s32.totalorder %s256, 3
      %s260 = scalar_select %p259, %s256, 3
      %s261 = smul.addr %s258, 4
      %s262 = sadd.s32 %s260, %s261
      %s263 = smul.addr %s262, 4
      %s264 = scalar_lea.vmem %s2, %s263
      %s265 = smul.u32 4, %s19
      %p266 = scmp.lt.s32.totalorder %s18, 1
      %s267 = scalar_select %p266, %s18, 1
      %s268 = smul.addr %s267, 5
      %s269 = smul.addr %s268, 8
      %s270 = scalar_lea.vmem %s3, %s269
      %p271 = scmp.eq.s32.totalorder %s19, 0
      // Predicated region
      $region33: #{dice_loss_v2.1} parent=31 // pred_check
        %p272 = pneg %p271
      $region34: #{dice_loss_v2.1} parent=31 // pred_check_branch
        %274 = sbr.rel (%p272) target = $region36
      $region35: #{dice_loss_v2.1} parent=31 // pred_region
        %275 = vst [vmem:[%s270] sm:$0xff] 0.0
        %276 = vst [vmem:[%s270 + $0x8] sm:$0xff] 0.0
        %277 = vst [vmem:[%s270 + $0x10] sm:$0xff] 0.0
        %278 = vst [vmem:[%s270 + $0x18] sm:$0xff] 0.0
        %279 = vst [vmem:[%s270 + $0x20] sm:$0xff] 0.0
      $region36: #{dice_loss_v2.1} parent=31 // pred_fallthru
        _
      %v280 = vld [vmem:[%s244] sm:$0xff]
      %v281 = vld [vmem:[%s244 + $0x8] sm:$0xff]
      %v282 = vld [vmem:[%s244 + $0x10] sm:$0xff]
      %v283 = vld [vmem:[%s244 + $0x18] sm:$0xff]
      %v284 = vld [vmem:[%s254] sm:$0xff]
      %v285 = vld [vmem:[%s254 + $0x8] sm:$0xff]
      %v286 = vld [vmem:[%s254 + $0x10] sm:$0xff]
      %v287 = vld [vmem:[%s254 + $0x18] sm:$0xff]
      %v288 = vld [vmem:[%s264] sm:$0xf]
      %v289 = vld [vmem:[%s264 + $0x4] sm:$0xf]
      %v290 = vld [vmem:[%s264 + $0x8] sm:$0xf]
      %v291 = vld [vmem:[%s264 + $0xc] sm:$0xf]
      %v292 = vunpack.c.l.bf16 %v288
      %v293 = vunpack.c.l.bf16 %v289
      %v294 = vunpack.c.l.bf16 %v290
      %v295 = vunpack.c.l.bf16 %v291
      %v296 = vxor.u32 %v280, 2147483648
      %v297 = vxor.u32 %v281, 2147483648
      %v298 = vxor.u32 %v282, 2147483648
      %v299 = vxor.u32 %v283, 2147483648
      %v300 = vmul.f32 %v296, 1.442695
      %v301 = vpow.pop %v300
      %v302 = vmul.f32 %v297, 1.442695
      %v303 = vpow.pop %v302
      %v304 = vmul.f32 %v298, 1.442695
      %v305 = vpow.pop %v304
      %v306 = vmul.f32 %v299, 1.442695
      %v307 = vpow.pop %v306
      %v308 = vadd.f32 %v301, 1.0
      %v309 = vadd.f32 %v303, 1.0
      %v310 = vadd.f32 %v305, 1.0
      %v311 = vadd.f32 %v307, 1.0
      %v312 = vrcp.pop %v308
      %v313 = vmul.f32 1.0, %v312
      %v314 = vrcp.pop %v309
      %v315 = vmul.f32 1.0, %v314
      %v316 = vrcp.pop %v310
      %v317 = vmul.f32 1.0, %v316
      %v318 = vrcp.pop %v311
      %v319 = vmul.f32 1.0, %v318
      %v320 = vld [vmem:[%s270] sm:$0xff]
      %v321 = vmul.f32 %v313, %v284
      %v322 = vmul.f32 %v315, %v285
      %v323 = vmul.f32 %v317, %v286
      %v324 = vmul.f32 %v319, %v287
      %v325 = vadd.f32 %v321, %v322
      %v326 = vadd.f32 %v325, %v323
      %v327 = vadd.f32 %v326, %v324
      %v328 = vadd.f32 %v320, %v327
      %329 = vst [vmem:[%s270] sm:$0xff] %v328
      %v330 = vld [vmem:[%s270 + $0x8] sm:$0xff]
      %v331 = vmul.f32 %v313, %v292
      %v332 = vmul.f32 %v315, %v293
      %v333 = vmul.f32 %v317, %v294
      %v334 = vmul.f32 %v319, %v295
      %v335 = vadd.f32 %v331, %v332
      %v336 = vadd.f32 %v335, %v333
      %v337 = vadd.f32 %v336, %v334
      %v338 = vadd.f32 %v330, %v337
      %339 = vst [vmem:[%s270 + $0x8] sm:$0xff] %v338
      %v340 = vld [vmem:[%s270 + $0x10] sm:$0xff]
      %v341 = vadd.f32 %v313, %v315
      %v342 = vadd.f32 %v341, %v317
      %v343 = vadd.f32 %v342, %v319
      %v344 = vadd.f32 %v340, %v343
      %345 = vst [vmem:[%s270 + $0x10] sm:$0xff] %v344
      %v346 = vld [vmem:[%s270 + $0x18] sm:$0xff]
      %v347 = vadd.f32 %v284, %v285
      %v348 = vadd.f32 %v347, %v286
      %v349 = vadd.f32 %v348, %v287
      %v350 = vadd.f32 %v346, %v349
      %351 = vst [vmem:[%s270 + $0x18] sm:$0xff] %v350
      %v352 = vld [vmem:[%s270 + $0x20] sm:$0xff]
      %v353 = vadd.f32 %v292, %v293
      %v354 = vadd.f32 %v353, %v294
      %v355 = vadd.f32 %v354, %v295
      %v356 = vadd.f32 %v352, %v355
      %357 = vst [vmem:[%s270 + $0x20] sm:$0xff] %v356
      %p358 = scmp.lt.s32.totalorder %s18, 1
      %s359 = scalar_select %p358, %s18, 1
      %s360 = smul.addr %s359, 5
      %s361 = smul.addr %s360, 8
      %s362 = scalar_lea.vmem %s3, %s361
      // Predicated region
      $region37: #{dice_loss_v2.1} parent=31 // pred_check
        %p363 = pneg %p128
      $region38: #{dice_loss_v2.1} parent=31 // pred_check_branch
        %365 = sbr.rel (%p363) target = $region40
      $region39: #{dice_loss_v2.1} parent=31 // pred_region
        _
      $region40: #{dice_loss_v2.1} parent=31 // pred_fallthru
        _
    $region32: #{dice_loss_v2.1} parent=5 // pred_fallthru
      _
    %p366 = scmp.le.s32.totalorder 2, %s9
    // Predicated region
    $region41: #{dice_loss_v2.1} parent=5 // pred_check
      %p367 = pneg %p366
    $region42: #{dice_loss_v2.1} parent=5 // pred_check_branch
      %369 = sbr.rel (%p367) target = $region44
    $region43: #{dice_loss_v2.1} parent=5 // pred_region
      %s370 = ssub.s32 %s9, 2
      // Predicated region
      $region45: #{dice_loss_v2.1} parent=43 // pred_check
        %p371 = pneg %p134
      $region46: #{dice_loss_v2.1} parent=43 // pred_check_branch
        %373 = sbr.rel (%p371) target = $region48
      $region47: #{dice_loss_v2.1} parent=43 // pred_region
        %p374 = scmp.lt.s32.totalorder %s20, 1
        %s375 = scalar_select %p374, %s20, 1
        %s376 = smul.addr %s375, 5
        %s377 = smul.addr %s376, 8
        %s378 = scalar_lea.vmem %s3, %s377
      $region48: #{dice_loss_v2.1} parent=43 // pred_fallthru
        _
    $region44: #{dice_loss_v2.1} parent=5 // pred_fallthru
      _
  $region6: #{dice_loss_v2.1} parent=0 // loop_footer
    %s13 = sadd.s32 1, %s9
  $region7: #{dice_loss_v2.1} parent=0 // loop_footer_branch
    %8 = sbr.rel target = $region3
  $region8: #{dice_loss_v2.1} parent=0 // loop_exit
    _

</llo_original>
